<compile_context>
chip_gen: v7x
topology: tpu7x:2x2x1
jax: 0.10.0
libtpu: 0.0.40
codegen_flags: <defaults>
</compile_context>

<pallas_src>
import jax
import jax.numpy as jnp
from jax.experimental import pallas as pl
from jax.experimental.pallas import tpu as pltpu


_LANE_CANDIDATES = (512, 256, 128)  # preferred lane-dense widths (mult. of 128)
_ROW_ALIGN = 32                     # covers sublane packing f32(8)/bf16(16)/int8,fp8(32)
_MIN_GRID_STEPS = 8                 # keep several parallel steps for v7x's 2 TCs


def _es_denorm_kernel(scales_ref, x_ref, st_ref, o_ref):
    # scales_ref: SMEM f32[2] = [alpha, 1/(1-alpha)]  (runtime scalars)
    alpha = scales_ref[0]
    inv = scales_ref[1]
    xv = x_ref[...].astype(jnp.float32)
    sv = st_ref[...].astype(jnp.float32)
    o_ref[...] = ((xv - alpha * sv) * inv).astype(o_ref.dtype)


def _round_up(n: int, m: int) -> int:
    return ((n + m - 1) // m) * m


def _vmem_capacity_bytes() -> int:
    try:
        cap = getattr(pltpu.get_tpu_info(), "vmem_capacity_bytes", None)
        if cap:
            return int(cap)
    except Exception:
        pass
    return 64 << 20  # conservative fallback: v7x per-TensorCore VMEM


def _pick_2d_view(shape, n: int):
    """Pick a (rows, lane_width) factorization of the flat element count."""
    for w in _LANE_CANDIDATES:
        if n % w == 0:
            return n // w, w           # lane-dense, unmasked stores
    # Unaligned total size: use the original trailing dim as lane width. A
    # block whose last dim equals the full array dim is always legal; stores
    # are masked but no pad/slice HBM passes are needed.
    d = int(shape[-1]) if len(shape) >= 1 else n
    d = max(1, d)
    return n // d, d


def es_denormalize(x: jax.Array, st: jax.Array, alpha, *, donate_x: bool = False):
    """Pallas TPU implementation of ES_DeNormalize.forward.

    Returns (x - alpha * st) / (1 - alpha) with x's dtype (elementwise; any shape).
    """
    assert x.shape == st.shape, "x and st must have the same shape"
    if isinstance(alpha, (int, float)):
        assert abs(1.0 - float(alpha)) > 1e-12, "alpha == 1.0 would divide by zero"

    orig_shape = x.shape
    dtype = x.dtype
    n = x.size
    itemsize = jnp.dtype(dtype).itemsize

    rows, lane_w = _pick_2d_view(orig_shape, n)
    x2d = x.reshape(rows, lane_w)    # free reshape (row-major contiguous)
    st2d = st.reshape(rows, lane_w)

    # --- Generation-aware tile sizing ---------------------------------------
    vmem_cap = _vmem_capacity_bytes()
    # ~8 MiB/buffer on 128 MiB-VMEM chips (v5e/v6e), ~5 MiB on v7x (64 MiB/TC).
    tile_budget = (8 << 20) if vmem_cap >= (96 << 20) else (5 << 20)

    bytes_per_row = max(1, lane_w * itemsize)
    max_rows_vmem = max(_ROW_ALIGN,
                        (tile_budget // bytes_per_row) // _ROW_ALIGN * _ROW_ALIGN)
    # Cap the tile so large inputs yield >= _MIN_GRID_STEPS parallel grid steps.
    rows_for_steps = _round_up(max(1, pl.cdiv(rows, _MIN_GRID_STEPS)), _ROW_ALIGN)
    row_tile = max(_ROW_ALIGN, min(max_rows_vmem, rows_for_steps))
    if row_tile >= rows:
        row_tile = rows              # block == full dim (always legal), 1 step
    grid = (pl.cdiv(rows, row_tile),)

    # VMEM budget: 3 arrays x 2 pipeline buffers x tile + headroom, capped at
    # ~85% of physical so v7x (64 MiB/TC) never OOMs and v5e's 16 MiB scoped
    # default is raised enough for full double-buffering.
    tile_bytes = row_tile * lane_w * itemsize
    vmem_limit = min(int(vmem_cap * 0.85),
                     max(32 << 20, 6 * tile_bytes + (8 << 20)))

    # Runtime scalars in SMEM: no recompile per alpha, traced alpha works.
    alpha_f = jnp.asarray(alpha, dtype=jnp.float32)
    scales = jnp.stack([alpha_f, 1.0 / (1.0 - alpha_f)])

    data_spec = pl.BlockSpec((row_tile, lane_w), lambda r: (r, 0))
    out2d = pl.pallas_call(
        _es_denorm_kernel,
        out_shape=jax.ShapeDtypeStruct((rows, lane_w), dtype),
        grid_spec=pltpu.PrefetchScalarGridSpec(
            num_scalar_prefetch=0,
            grid=grid,
            in_specs=[
                pl.BlockSpec(memory_space=pltpu.MemorySpace.SMEM),  # scales
                data_spec,                                          # x
                data_spec,                                          # st
            ],
            out_specs=pl.BlockSpec((row_tile, lane_w), lambda r: (r, 0)),
        ),
        compiler_params=pltpu.CompilerParams(
            dimension_semantics=("parallel",),
            vmem_limit_bytes=vmem_limit,
        ),
        input_output_aliases=({1: 0} if donate_x else {}),
    )(scales, x2d, st2d)

    return out2d.reshape(orig_shape)


def es_denormalize_ref(x, st, alpha):
    # Pure-JAX reference matching the PyTorch loop semantics.
    return (x - alpha * st) / (1.0 - alpha)


if __name__ == "__main__":
    key = jax.random.PRNGKey(0)
    alpha = 0.3
    k1, k2, k3, k4, k5, k6 = jax.random.split(key, 6)

    # Case 1: aligned shape (last dim multiple of 128) -> lane-dense fast path.
    B, T, D = 2, 8, 128
    x = jax.random.normal(k1, (B, T, D), dtype=jnp.float32)
    st = jax.random.normal(k2, (B, T, D), dtype=jnp.float32)
    out = jax.block_until_ready(es_denormalize(x, st, alpha))
    ref = es_denormalize_ref(x, st, alpha)
    assert out.shape == ref.shape and out.dtype == ref.dtype
    assert jnp.allclose(out, ref, rtol=1e-5, atol=1e-5), "mismatch (aligned case)"

    # Case 2: unaligned feature dim -> full-trailing-dim blocks (no pad/slice).
    x2 = jax.random.normal(k3, (2, 4, 100), dtype=jnp.float32)
    st2 = jax.random.normal(k4, (2, 4, 100), dtype=jnp.float32)
    out2 = jax.block_until_ready(es_denormalize(x2, st2, alpha))
    ref2 = es_denormalize_ref(x2, st2, alpha)
    assert out2.shape == ref2.shape and out2.dtype == ref2.dtype
    assert jnp.allclose(out2, ref2, rtol=1e-5, atol=1e-5), "mismatch (unaligned case)"

    # Case 3: bf16, large enough to exercise a multi-step parallel grid.
    x3 = jax.random.normal(k5, (4, 64, 384), dtype=jnp.bfloat16)
    st3 = jax.random.normal(k6, (4, 64, 384), dtype=jnp.bfloat16)
    out3 = jax.block_until_ready(es_denormalize(x3, st3, alpha))
    ref3 = es_denormalize_ref(
        x3.astype(jnp.float32), st3.astype(jnp.float32), alpha
    ).astype(jnp.bfloat16)
    assert out3.shape == ref3.shape and out3.dtype == jnp.bfloat16
    assert jnp.allclose(out3.astype(jnp.float32), ref3.astype(jnp.float32),
                        rtol=2e-2, atol=2e-2), "mismatch (bf16 case)"

    print("KERNEL_OK")
</pallas_src>

<mosaic_0001>
module attributes {stable_mosaic.version = 11 : i64} {
  func.func @_es_denorm_kernel(%arg0: i32, %arg1: memref<2xf32, #tpu.memory_space<smem>>, %arg2: memref<4x512xf32, #tpu.memory_space<vmem>>, %arg3: memref<4x512xf32, #tpu.memory_space<vmem>>, %arg4: memref<4x512xf32, #tpu.memory_space<vmem>>) attributes {dimension_semantics = [#tpu.dimension_semantics<parallel>], iteration_bounds = array<i64: 1>, scalar_prefetch = 0 : i64, scratch_operands = 0 : i64, tpu.core_type = #tpu.core_type<tc>, window_params = [{transform_indices = @transform_0, window_bounds = array<i64: 2>}, {transform_indices = @transform_1, window_bounds = array<i64: 4, 512>}, {transform_indices = @transform_2, window_bounds = array<i64: 4, 512>}, {transform_indices = @transform_3, window_bounds = array<i64: 4, 512>}]} {
    %c0 = arith.constant 0 : index
    %0 = memref.load %arg1[%c0] : memref<2xf32, #tpu.memory_space<smem>>
    %c1 = arith.constant 1 : index
    %1 = memref.load %arg1[%c1] : memref<2xf32, #tpu.memory_space<smem>>
    %c0_0 = arith.constant 0 : index
    %c0_1 = arith.constant 0 : index
    %2 = vector.load %arg2[%c0_0, %c0_1] : memref<4x512xf32, #tpu.memory_space<vmem>>, vector<4x512xf32>
    %c0_2 = arith.constant 0 : index
    %c0_3 = arith.constant 0 : index
    %3 = vector.load %arg3[%c0_2, %c0_3] : memref<4x512xf32, #tpu.memory_space<vmem>>, vector<4x512xf32>
    %4 = vector.broadcast %0 : f32 to vector<4x512xf32>
    %5 = arith.mulf %4, %3 : vector<4x512xf32>
    %6 = arith.subf %2, %5 : vector<4x512xf32>
    %7 = vector.broadcast %1 : f32 to vector<4x512xf32>
    %8 = arith.mulf %6, %7 : vector<4x512xf32>
    %c0_4 = arith.constant 0 : index
    %c0_5 = arith.constant 0 : index
    %9 = vector.load %arg4[%c0_4, %c0_5] : memref<4x512xf32, #tpu.memory_space<vmem>>, vector<4x512xf32>
    tpu.vector_store %arg4[%c0_4, %c0_5], %8 {strides = array<i32>} : memref<4x512xf32, #tpu.memory_space<vmem>>, vector<4x512xf32>,
    return
  }
  func.func @transform_0(%arg0: i32) -> i32 {
    %c0_i32 = arith.constant 0 : i32
    %c0_i32_0 = arith.constant 0 : i32
    return %c0_i32 : i32
  }
  func.func @transform_1(%arg0: i32) -> (i32, i32) {
    %c0_i32 = arith.constant 0 : i32
    %c0_i32_0 = arith.constant 0 : i32
    return %arg0, %c0_i32 : i32, i32
  }
  func.func @transform_2(%arg0: i32) -> (i32, i32) {
    %c0_i32 = arith.constant 0 : i32
    %c0_i32_0 = arith.constant 0 : i32
    return %arg0, %c0_i32 : i32, i32
  }
  func.func @transform_3(%arg0: i32) -> (i32, i32) {
    %c0_i32 = arith.constant 0 : i32
    %c0_i32_0 = arith.constant 0 : i32
    return %arg0, %c0_i32 : i32, i32
  }
}

</mosaic_0001>

<llo_original>
// kernel: tpu_custom_call.1
$region0: #{tpu_custom_call.1}
  #allocation0 [shape = 'u32[]', space=smem, size = 0x4, offset = 0x4, fixed_abs, tag = 'smem constant byte address 0x4 - core index']
  #allocation1 [shape = 'u32[144,128]{1,0:T(1,128)}', space=vmem, size = 0x12000, scoped, tag = 'internal scratch']
  %s0 = inlined_call_operand.hbm [shape: f32[2], index: 0, kind: input, shape index: {}]
  %s1 = inlined_call_operand.hbm [shape: f32[4,512], index: 1, kind: input, shape index: {}]
  %s2 = inlined_call_operand.hbm [shape: f32[4,512], index: 2, kind: input, shape index: {}]
  %s3 = inlined_call_operand.hbm [shape: f32[4,512], index: 3, kind: output, shape index: {}]
  %s4 = sld [smem:[#allocation0]]
  $region34: #{tpu_custom_call.1} parent=0
    _
  %s6 = ssub.s32 1, %s4
  %s7 = scalar_select 0, %s6, %s4
  $region1: #{tpu_custom_call.1} parent=0
    #allocation2 [shape = 'u8[512]{0}', space=smem, size = 0x200, scoped, tag = 'input window, operand 0, single buffered']
    #allocation3 [shape = 's32[1]{0}', space=sflag, size = 0x4, scoped, tag = 'scoped memory for tpu_custom_call.1']
    #allocation4 [shape = 's32[1]{0}', space=sflag, size = 0x4, scoped, tag = 'scoped memory for tpu_custom_call.1']
    #allocation5 [shape = 's32[1]{0}', space=sflag, size = 0x4, scoped, tag = 'scoped memory for tpu_custom_call.1']
    #allocation6 [shape = 'u8[8192]{0}', space=vmem, size = 0x2000, scoped, tag = 'input window, operand 1, single buffered']
    #allocation7 [shape = 'u8[8192]{0}', space=vmem, size = 0x2000, scoped, tag = 'input window, operand 2, single buffered']
    #allocation8 [shape = 's32[1]{0}', space=sflag, size = 0x4, scoped, tag = 'scoped memory for tpu_custom_call.1']
    #allocation9 [shape = 'u8[8192]{0}', space=vmem, size = 0x2000, scoped, tag = 'output window, operand 0, single buffered']
    %8 = vsyncpa [#allocation5], 0
    %9 = vsyncpa [#allocation3], 0
    %10 = vsyncpa [#allocation8], 0
    %11 = vsyncpa [#allocation4], 0
    // Predicated region
    $region2: #{tpu_custom_call.1} parent=1 // pred_check
      _
    $region3: #{tpu_custom_call.1} parent=1 // pred_check_branch
      %13 = sbr.rel (0) target = $region5
    $region4: #{tpu_custom_call.1} parent=1 // pred_region
      %s15 = ssub.s32 16, 16
      %16 = vsyncadd [#allocation5], %s15
      %19 = dma.hbm_to_smem %s0, 16, [#allocation2], [#allocation5]
    $region5: #{tpu_custom_call.1} parent=1 // pred_fallthru
      _
    // Predicated region
    $region6: #{tpu_custom_call.1} parent=1 // pred_check
      _
    $region7: #{tpu_custom_call.1} parent=1 // pred_check_branch
      %21 = sbr.rel (0) target = $region9
    $region8: #{tpu_custom_call.1} parent=1 // pred_region
      %s23 = ssub.s32 256, 256
      %24 = vsyncadd [#allocation3], %s23
      %s26 = sshll.u32 [#allocation6], 4
      %s27 = int_to_ptr.vmem [resolvable:$true] %s26
      %29 = dma.hbm_to_vmem [thread:$0]  %s1, 256, %s27, [#allocation3]
    $region9: #{tpu_custom_call.1} parent=1 // pred_fallthru
      _
    // Predicated region
    $region10: #{tpu_custom_call.1} parent=1 // pred_check
      _
    $region11: #{tpu_custom_call.1} parent=1 // pred_check_branch
      %31 = sbr.rel (0) target = $region13
    $region12: #{tpu_custom_call.1} parent=1 // pred_region
      %s33 = ssub.s32 256, 256
      %34 = vsyncadd [#allocation8], %s33
      %s36 = sshll.u32 [#allocation7], 4
      %s37 = int_to_ptr.vmem [resolvable:$true] %s36
      %39 = dma.hbm_to_vmem [thread:$0]  %s2, 256, %s37, [#allocation8]
    $region13: #{tpu_custom_call.1} parent=1 // pred_fallthru
      _
    // Predicated region
    $region14: #{tpu_custom_call.1} parent=1 // pred_check
      _
    $region15: #{tpu_custom_call.1} parent=1 // pred_check_branch
      %41 = sbr.rel (0) target = $region17
    $region16: #{tpu_custom_call.1} parent=1 // pred_region
      %42 = dma.done [#allocation5], 16
    $region17: #{tpu_custom_call.1} parent=1 // pred_fallthru
      _
    // Predicated region
    $region18: #{tpu_custom_call.1} parent=1 // pred_check
      _
    $region19: #{tpu_custom_call.1} parent=1 // pred_check_branch
      %44 = sbr.rel (0) target = $region21
    $region20: #{tpu_custom_call.1} parent=1 // pred_region
      %45 = dma.done [#allocation3], 256
    $region21: #{tpu_custom_call.1} parent=1 // pred_fallthru
      _
    // Predicated region
    $region22: #{tpu_custom_call.1} parent=1 // pred_check
      _
    $region23: #{tpu_custom_call.1} parent=1 // pred_check_branch
      %47 = sbr.rel (0) target = $region25
    $region24: #{tpu_custom_call.1} parent=1 // pred_region
      %48 = dma.done [#allocation8], 256
    $region25: #{tpu_custom_call.1} parent=1 // pred_fallthru
      _
    %49 = sfence
    %s50 = sld [smem:[#allocation2]]
    %s51 = sld [smem:[#allocation2 + $0x1]]
    %v52 = vld [vmem:[#allocation6] sm:$0xff]
    %v53 = vld [vmem:[#allocation6 + $0x8] sm:$0xff]
    %v54 = vld [vmem:[#allocation7] sm:$0xff]
    %v55 = vld [vmem:[#allocation7 + $0x8] sm:$0xff]
    %v56 = vstv %s50
    %v57 = vmul.f32 %v56, %v54
    %v58 = vmul.f32 %v56, %v55
    %v59 = vsub.f32 %v52, %v57
    %v60 = vsub.f32 %v53, %v58
    %v61 = vstv %s51
    %v62 = vmul.f32 %v59, %v61
    %v63 = vmul.f32 %v60, %v61
    %64 = vst [vmem:[#allocation9] sm:$0xff] %v62
    %65 = vst [vmem:[#allocation9 + $0x8] sm:$0xff] %v63
    // Predicated region
    $region26: #{tpu_custom_call.1} parent=1 // pred_check
      _
    $region27: #{tpu_custom_call.1} parent=1 // pred_check_branch
      %67 = sbr.rel (0) target = $region29
    $region28: #{tpu_custom_call.1} parent=1 // pred_region
      %s69 = ssub.s32 256, 256
      %70 = vsyncadd [#allocation4], %s69
      %s72 = sshll.u32 [#allocation9], 4
      %s73 = int_to_ptr.vmem [resolvable:$true] %s72
      %75 = dma.vmem_to_hbm [thread:$0]  %s73, 256, %s3, [#allocation4]
    $region29: #{tpu_custom_call.1} parent=1 // pred_fallthru
      _
    // Predicated region
    $region30: #{tpu_custom_call.1} parent=1 // pred_check
      _
    $region31: #{tpu_custom_call.1} parent=1 // pred_check_branch
      %77 = sbr.rel (0) target = $region33
    $region32: #{tpu_custom_call.1} parent=1 // pred_region
      %78 = dma.done [#allocation4], 256
    $region33: #{tpu_custom_call.1} parent=1 // pred_fallthru
      _
    %79 = vsyncpa [#allocation3], 1
    %80 = vsyncpa [#allocation8], 1
    %81 = vsyncpa [#allocation4], 1
    %82 = vsyncpa [#allocation5], 1

</llo_original>
